<compile_context>
chip_gen: v5e
topology: v5e:2x2
jax: 0.10.0
libtpu: 0.0.40
codegen_flags: <defaults>
</compile_context>

<pallas_src>
import functools

import jax
import jax.numpy as jnp
from jax.experimental import pallas as pl
from jax.experimental.pallas import tpu as pltpu

PROBLEM_NUMBER = 8
APPROX_STEPS = 24
INPUT_DIM = PROBLEM_NUMBER                     # 8
HIDDEN_DIM = PROBLEM_NUMBER + APPROX_STEPS     # 32
OUTPUT_DIM = APPROX_STEPS                      # 24

PACK = 16                                      # logical rows packed per lane-row
K_PACKED = PACK * INPUT_DIM                    # 128 (full lane width / MXU K)
N_PACKED = PACK * OUTPUT_DIM                   # 384 (3 * 128 -> unmasked stores)

DEFAULT_TILE_PACKED = 512                      # packed rows / step = 8192 logical rows


def _round_up(n, m):
    return (n + m - 1) // m * m


def _fused_affine_kernel(x_ref, w_ref, b_ref, o_ref):
    # One MXU matmul (K=128, N=384) + one broadcast VPU bias add per tile.
    o_ref[...] = (
        jnp.dot(x_ref[...], w_ref[...], preferred_element_type=jnp.float32)
        + b_ref[...]
    ).astype(o_ref.dtype)


def prepare_params(w1, b1, w2, b2):
    """Fold both linear layers into one affine map and lane-pack it.

    Returns (w_blk, b_blk) with shapes (128, 384) / (1, 384):
      * fusion:  (x @ w1 + b1) @ w2 + b2 == x @ (w1 @ w2) + (b1 @ w2 + b2)
      * packing: block-diagonal so 16 batch rows share one 128-lane row.
    Static per model -> hoist out of the per-call path.
    """
    w_fused = jnp.dot(w1, w2)                        # (8, 24)
    b_fused = jnp.dot(b1, w2) + b2                   # (1, 24)
    eye = jnp.eye(PACK, dtype=jnp.float32)
    # w_blk[p*8 + i, q*24 + o] = (p == q) * w_fused[i, o]
    w_blk = jnp.einsum("pq,io->piqo", eye, w_fused).reshape(K_PACKED, N_PACKED)
    b_blk = jnp.tile(b_fused, (1, PACK))             # (1, 384)
    return w_blk, b_blk


@functools.partial(jax.jit, static_argnames=("tile_packed",))
def network_forward_packed(x, w_blk, b_blk, *, tile_packed=DEFAULT_TILE_PACKED):
    """x: (B, 8) f32; w_blk: (128, 384); b_blk: (1, 384) -> (B, 24) f32."""
    B = x.shape[0]

    # Lane-pack 16 logical rows per 128-lane row (free, contiguous reshape).
    # Pad only when B isn't a multiple of 16 (tiny; usually a no-op).
    b16 = _round_up(B, PACK)
    if b16 != B:
        x = jnp.pad(x, ((0, b16 - B), (0, 0)))
    n_packed = b16 // PACK
    x_packed = x.reshape(n_packed, K_PACKED)

    # Ragged grid: Mosaic clips the last block on writeback (no pad-to-tile).
    tile_packed = min(tile_packed, _round_up(n_packed, 8))
    grid = (pl.cdiv(n_packed, tile_packed),)

    cost = pl.CostEstimate(
        flops=2 * n_packed * K_PACKED * N_PACKED,
        transcendentals=0,
        bytes_accessed=4 * (n_packed * K_PACKED               # read packed x
                            + n_packed * N_PACKED             # write packed out
                            + K_PACKED * N_PACKED + N_PACKED  # resident W / b
                            ),
    )

    out_packed = pl.pallas_call(
        _fused_affine_kernel,
        out_shape=jax.ShapeDtypeStruct((n_packed, N_PACKED), jnp.float32),
        grid=grid,
        in_specs=[
            pl.BlockSpec((tile_packed, K_PACKED), lambda i: (i, 0)),  # x batch tile
            pl.BlockSpec((K_PACKED, N_PACKED), lambda i: (0, 0)),     # W (VMEM-resident)
            pl.BlockSpec((1, N_PACKED), lambda i: (0, 0)),            # b (VMEM-resident)
        ],
        out_specs=pl.BlockSpec((tile_packed, N_PACKED), lambda i: (i, 0)),
        compiler_params=pltpu.CompilerParams(
            dimension_semantics=("parallel",),  # v7x: shard batch tiles across both TCs
        ),
        cost_estimate=cost,
    )(x_packed, w_blk, b_blk)

    out = out_packed.reshape(b16, OUTPUT_DIM)  # free, contiguous unpack
    return out if b16 == B else out[:B]


def network_forward(x, w1, b1, w2, b2, *, tile_packed=DEFAULT_TILE_PACKED):
    """Convenience wrapper: fuse/pack weights then run the packed kernel."""
    w_blk, b_blk = prepare_params(w1, b1, w2, b2)
    return network_forward_packed(x, w_blk, b_blk, tile_packed=tile_packed)


def init_params(key):
    """Deterministic init matching torch.nn.Linear default:
       U(-1/sqrt(fan_in), 1/sqrt(fan_in)) for both weight and bias."""
    k1, k2, k3, k4 = jax.random.split(key, 4)
    bound1 = 1.0 / (INPUT_DIM ** 0.5)
    bound2 = 1.0 / (HIDDEN_DIM ** 0.5)
    w1 = jax.random.uniform(k1, (INPUT_DIM, HIDDEN_DIM), jnp.float32,
                            minval=-bound1, maxval=bound1)
    b1 = jax.random.uniform(k2, (1, HIDDEN_DIM), jnp.float32,
                            minval=-bound1, maxval=bound1)
    w2 = jax.random.uniform(k3, (HIDDEN_DIM, OUTPUT_DIM), jnp.float32,
                            minval=-bound2, maxval=bound2)
    b2 = jax.random.uniform(k4, (1, OUTPUT_DIM), jnp.float32,
                            minval=-bound2, maxval=bound2)
    return w1, b1, w2, b2


if __name__ == "__main__":
    key = jax.random.PRNGKey(0)
    k_x, k_p, k_x2 = jax.random.split(key, 3)

    w1, b1, w2, b2 = init_params(k_p)
    w_blk, b_blk = prepare_params(w1, b1, w2, b2)   # hoisted once per model

    def ref_fn(x):
        return (x @ w1 + b1) @ w2 + b2

    # Small batch (pads to one packed row, single grid step).
    x_small = jax.random.normal(k_x, (4, INPUT_DIM), jnp.float32)
    out_small = jax.block_until_ready(network_forward_packed(x_small, w_blk, b_blk))
    assert out_small.shape == (4, OUTPUT_DIM)
    assert jnp.allclose(out_small, ref_fn(x_small), atol=2e-5, rtol=2e-5)

    # Larger batch, not a multiple of 16 or of the tile -> exercises the tiny
    # 16-row pad, the multi-step pipelined grid, and ragged last-block clipping.
    x_big = jax.random.normal(k_x2, (9992, INPUT_DIM), jnp.float32)
    out_big = jax.block_until_ready(network_forward_packed(x_big, w_blk, b_blk))
    assert out_big.shape == (9992, OUTPUT_DIM)
    assert jnp.allclose(out_big, ref_fn(x_big), atol=2e-5, rtol=2e-5)

    print("KERNEL_OK")
</pallas_src>

<mosaic_0001>
module attributes {stable_mosaic.version = 11 : i64} {
  func.func @_fused_affine_kernel(%arg0: i32, %arg1: memref<8x128xf32, #tpu.memory_space<vmem>>, %arg2: memref<128x384xf32, #tpu.memory_space<vmem>>, %arg3: memref<1x384xf32, #tpu.memory_space<vmem>>, %arg4: memref<8x384xf32, #tpu.memory_space<vmem>>) attributes {dimension_semantics = [#tpu.dimension_semantics<parallel>], iteration_bounds = array<i64: 1>, scalar_prefetch = 0 : i64, scratch_operands = 0 : i64, tpu.core_type = #tpu.core_type<tc>, window_params = [{transform_indices = @transform_0, window_bounds = array<i64: 8, 128>}, {pipeline_mode = #tpu.pipeline_mode<synchronous>, transform_indices = @transform_1, window_bounds = array<i64: 128, 384>}, {pipeline_mode = #tpu.pipeline_mode<synchronous>, transform_indices = @transform_2, window_bounds = array<i64: 1, 384>}, {transform_indices = @transform_3, window_bounds = array<i64: 8, 384>}]} {
    %c0 = arith.constant 0 : index
    %c0_0 = arith.constant 0 : index
    %0 = vector.load %arg1[%c0, %c0_0] : memref<8x128xf32, #tpu.memory_space<vmem>>, vector<8x128xf32>
    %c0_1 = arith.constant 0 : index
    %c0_2 = arith.constant 0 : index
    %1 = vector.load %arg2[%c0_1, %c0_2] : memref<128x384xf32, #tpu.memory_space<vmem>>, vector<128x384xf32>
    %cst = arith.constant dense<0.000000e+00> : vector<8x384xf32>
    %2 = tpu.matmul %0, %1, %cst {dimension_numbers = #tpu.dot_dimension_numbers<[1], [0], [0], [1], [0, 0, 1, 1], [], []>} : vector<8x128xf32>, vector<128x384xf32>, vector<8x384xf32> -> vector<8x384xf32>
    %c0_3 = arith.constant 0 : index
    %c0_4 = arith.constant 0 : index
    %3 = vector.load %arg3[%c0_3, %c0_4] : memref<1x384xf32, #tpu.memory_space<vmem>>, vector<1x384xf32>
    %4 = vector.broadcast %3 : vector<1x384xf32> to vector<8x384xf32>
    %5 = arith.addf %2, %4 : vector<8x384xf32>
    %c0_5 = arith.constant 0 : index
    %c0_6 = arith.constant 0 : index
    %6 = vector.load %arg4[%c0_5, %c0_6] : memref<8x384xf32, #tpu.memory_space<vmem>>, vector<8x384xf32>
    tpu.vector_store %arg4[%c0_5, %c0_6], %5 {strides = array<i32>} : memref<8x384xf32, #tpu.memory_space<vmem>>, vector<8x384xf32>,
    return
  }
  func.func @transform_0(%arg0: i32) -> (i32, i32) {
    %c0_i32 = arith.constant 0 : i32
    %c0_i32_0 = arith.constant 0 : i32
    return %arg0, %c0_i32 : i32, i32
  }
  func.func @transform_1(%arg0: i32) -> (i32, i32) {
    %c0_i32 = arith.constant 0 : i32
    %c0_i32_0 = arith.constant 0 : i32
    %c0_i32_1 = arith.constant 0 : i32
    return %c0_i32, %c0_i32_0 : i32, i32
  }
  func.func @transform_2(%arg0: i32) -> (i32, i32) {
    %c0_i32 = arith.constant 0 : i32
    %c0_i32_0 = arith.constant 0 : i32
    %c0_i32_1 = arith.constant 0 : i32
    return %c0_i32, %c0_i32_0 : i32, i32
  }
  func.func @transform_3(%arg0: i32) -> (i32, i32) {
    %c0_i32 = arith.constant 0 : i32
    %c0_i32_0 = arith.constant 0 : i32
    return %arg0, %c0_i32 : i32, i32
  }
}

</mosaic_0001>

<llo_original>
// kernel: network_forward_packed.1
$region0: #{network_forward_packed.1}
  #allocation0 [shape = 'u32[]', space=smem, size = 0x4, offset = 0x4, fixed_abs, tag = 'smem constant byte address 0x4 - core index']
  #allocation1 [shape = 'u32[72,128]{1,0:T(1,128)}', space=vmem, size = 0x9000, scoped, tag = 'internal scratch']
  %s0 = inlined_call_operand.vmem [shape: f32[1,128], index: 0, kind: input, shape index: {}]
  %s1 = inlined_call_operand.hbm [shape: f32[128,384], index: 1, kind: input, shape index: {}]
  %s2 = inlined_call_operand.vmem [shape: f32[1,384], index: 2, kind: input, shape index: {}]
  %s3 = inlined_call_operand.vmem [shape: f32[1,384], index: 3, kind: output, shape index: {}]
  %s4 = sld [smem:[#allocation0]]
  $region56: #{network_forward_packed.1} parent=0
    _
  %s6 = ssub.s32 1, %s4
  %s7 = scalar_select 0, %s6, %s4
  $region1: #{network_forward_packed.1} parent=0
    #allocation2 [shape = 'u8[196608]{0}', space=vmem, size = 0x30000, scoped, tag = 'input window, operand 1, single buffered']
    #allocation3 [shape = 's32[1]{0}', space=sflag, size = 0x4, scoped, tag = 'scoped memory for network_forward_packed.1']
    #allocation4 [shape = 'u8[12288]{0}', space=vmem, size = 0x3000, scoped, tag = 'output window, operand 0, single buffered']
    %8 = vsyncpa [#allocation3], 0
    // Predicated region
    $region2: #{network_forward_packed.1} parent=1 // pred_check
      _
    $region3: #{network_forward_packed.1} parent=1 // pred_check_branch
      %10 = sbr.rel (0) target = $region5
    $region4: #{network_forward_packed.1} parent=1 // pred_region
      _
    $region5: #{network_forward_packed.1} parent=1 // pred_fallthru
      _
    // Predicated region
    $region6: #{network_forward_packed.1} parent=1 // pred_check
      _
    $region7: #{network_forward_packed.1} parent=1 // pred_check_branch
      %12 = sbr.rel (0) target = $region9
    $region8: #{network_forward_packed.1} parent=1 // pred_region
      %14 = vsyncadd [#allocation3], 0
      %s15 = sshll.u32 %s1, 4
      %s16 = int_to_ptr.hbm [resolvable:$true] %s15
      %s17 = sshll.u32 [#allocation2], 4
      %s18 = int_to_ptr.vmem [resolvable:$true] %s17
      %23 = dma.hbm_to_vmem [thread:$0]  %s16, 6144, %s18, [#allocation3], 384, 384, 24
    $region9: #{network_forward_packed.1} parent=1 // pred_fallthru
      _
    // Predicated region
    $region10: #{network_forward_packed.1} parent=1 // pred_check
      _
    $region11: #{network_forward_packed.1} parent=1 // pred_check_branch
      %25 = sbr.rel (0) target = $region13
    $region12: #{network_forward_packed.1} parent=1 // pred_region
      _
    $region13: #{network_forward_packed.1} parent=1 // pred_fallthru
      _
    // Predicated region
    $region14: #{network_forward_packed.1} parent=1 // pred_check
      _
    $region15: #{network_forward_packed.1} parent=1 // pred_check_branch
      %27 = sbr.rel (0) target = $region17
    $region16: #{network_forward_packed.1} parent=1 // pred_region
      %29 = dma.done [#allocation3], 6144
    $region17: #{network_forward_packed.1} parent=1 // pred_fallthru
      _
    %v30 = vld [vmem:[%s0] sm:$0xff]
    %v31 = vld [vmem:[#allocation2] sm:$0xff]
    %v32 = vld [vmem:[#allocation2 + $0x8] sm:$0xff]
    %v33 = vld [vmem:[#allocation2 + $0x10] sm:$0xff]
    %v34 = vld [vmem:[#allocation2 + $0x18] sm:$0xff]
    %v35 = vld [vmem:[#allocation2 + $0x20] sm:$0xff]
    %v36 = vld [vmem:[#allocation2 + $0x28] sm:$0xff]
    %v37 = vld [vmem:[#allocation2 + $0x30] sm:$0xff]
    %v38 = vld [vmem:[#allocation2 + $0x38] sm:$0xff]
    %v39 = vld [vmem:[#allocation2 + $0x40] sm:$0xff]
    %v40 = vld [vmem:[#allocation2 + $0x48] sm:$0xff]
    %v41 = vld [vmem:[#allocation2 + $0x50] sm:$0xff]
    %v42 = vld [vmem:[#allocation2 + $0x58] sm:$0xff]
    %v43 = vld [vmem:[#allocation2 + $0x60] sm:$0xff]
    %v44 = vld [vmem:[#allocation2 + $0x68] sm:$0xff]
    %v45 = vld [vmem:[#allocation2 + $0x70] sm:$0xff]
    %v46 = vld [vmem:[#allocation2 + $0x78] sm:$0xff]
    %v47 = vld [vmem:[#allocation2 + $0x80] sm:$0xff]
    %v48 = vld [vmem:[#allocation2 + $0x88] sm:$0xff]
    %v49 = vld [vmem:[#allocation2 + $0x90] sm:$0xff]
    %v50 = vld [vmem:[#allocation2 + $0x98] sm:$0xff]
    %v51 = vld [vmem:[#allocation2 + $0xa0] sm:$0xff]
    %v52 = vld [vmem:[#allocation2 + $0xa8] sm:$0xff]
    %v53 = vld [vmem:[#allocation2 + $0xb0] sm:$0xff]
    %v54 = vld [vmem:[#allocation2 + $0xb8] sm:$0xff]
    %v55 = vld [vmem:[#allocation2 + $0xc0] sm:$0xff]
    %v56 = vld [vmem:[#allocation2 + $0xc8] sm:$0xff]
    %v57 = vld [vmem:[#allocation2 + $0xd0] sm:$0xff]
    %v58 = vld [vmem:[#allocation2 + $0xd8] sm:$0xff]
    %v59 = vld [vmem:[#allocation2 + $0xe0] sm:$0xff]
    %v60 = vld [vmem:[#allocation2 + $0xe8] sm:$0xff]
    %v61 = vld [vmem:[#allocation2 + $0xf0] sm:$0xff]
    %v62 = vld [vmem:[#allocation2 + $0xf8] sm:$0xff]
    %v63 = vld [vmem:[#allocation2 + $0x100] sm:$0xff]
    %v64 = vld [vmem:[#allocation2 + $0x108] sm:$0xff]
    %v65 = vld [vmem:[#allocation2 + $0x110] sm:$0xff]
    %v66 = vld [vmem:[#allocation2 + $0x118] sm:$0xff]
    %v67 = vld [vmem:[#allocation2 + $0x120] sm:$0xff]
    %v68 = vld [vmem:[#allocation2 + $0x128] sm:$0xff]
    %v69 = vld [vmem:[#allocation2 + $0x130] sm:$0xff]
    %v70 = vld [vmem:[#allocation2 + $0x138] sm:$0xff]
    %v71 = vld [vmem:[#allocation2 + $0x140] sm:$0xff]
    %v72 = vld [vmem:[#allocation2 + $0x148] sm:$0xff]
    %v73 = vld [vmem:[#allocation2 + $0x150] sm:$0xff]
    %v74 = vld [vmem:[#allocation2 + $0x158] sm:$0xff]
    %v75 = vld [vmem:[#allocation2 + $0x160] sm:$0xff]
    %v76 = vld [vmem:[#allocation2 + $0x168] sm:$0xff]
    %v77 = vld [vmem:[#allocation2 + $0x170] sm:$0xff]
    %v78 = vld [vmem:[#allocation2 + $0x178] sm:$0xff]
    %v79 = vld [vmem:[%s2] sm:$0x7]
    %v81 = vperm.slane %v79, 0
    %v82 = vperm.slane %v79, 1
    %v83 = vperm.slane %v79, 2
    %87 = vmatpush.msra.mxu0 %v76
    %88 = vmatpush.msra.mxu0 %v73
    %89 = vmatpush.msra.mxu0 %v70
    %90 = vmatpush.msra.mxu0 %v67
    %91 = vmatpush.msra.mxu0 %v64
    %92 = vmatpush.msra.mxu0 %v61
    %93 = vmatpush.msra.mxu0 %v58
    %94 = vmatpush.msra.mxu0 %v55
    %95 = vmatpush.msra.mxu0 %v52
    %96 = vmatpush.msra.mxu0 %v49
    %97 = vmatpush.msra.mxu0 %v46
    %98 = vmatpush.msra.mxu0 %v43
    %99 = vmatpush.msra.mxu0 %v40
    %100 = vmatpush.msra.mxu0 %v37
    %101 = vmatpush.msra.mxu0 %v34
    %102 = vmatpush.msra.mxu0 %v31
    %103 = vmatmul.f32.gmra.mxu0 %v30
    %v104 = vpop.f32.mrf.mxu0
    %v105 = vadd.f32 %v81, %v104
    %106 = vdwg.mxu0
    %107 = vmatpush.msra.mxu0 %v77
    %108 = vmatpush.msra.mxu0 %v74
    %109 = vmatpush.msra.mxu0 %v71
    %110 = vmatpush.msra.mxu0 %v68
    %111 = vmatpush.msra.mxu0 %v65
    %112 = vmatpush.msra.mxu0 %v62
    %113 = vmatpush.msra.mxu0 %v59
    %114 = vmatpush.msra.mxu0 %v56
    %115 = vmatpush.msra.mxu0 %v53
    %116 = vmatpush.msra.mxu0 %v50
    %117 = vmatpush.msra.mxu0 %v47
    %118 = vmatpush.msra.mxu0 %v44
    %119 = vmatpush.msra.mxu0 %v41
    %120 = vmatpush.msra.mxu0 %v38
    %121 = vmatpush.msra.mxu0 %v35
    %122 = vmatpush.msra.mxu0 %v32
    %123 = vmatmul.f32.gmra.mxu0 %v30
    %v124 = vpop.f32.mrf.mxu0
    %v125 = vadd.f32 %v82, %v124
    %126 = vdwg.mxu0
    %127 = vmatpush.msra.mxu0 %v78
    %128 = vmatpush.msra.mxu0 %v75
    %129 = vmatpush.msra.mxu0 %v72
    %130 = vmatpush.msra.mxu0 %v69
    %131 = vmatpush.msra.mxu0 %v66
    %132 = vmatpush.msra.mxu0 %v63
    %133 = vmatpush.msra.mxu0 %v60
    %134 = vmatpush.msra.mxu0 %v57
    %135 = vmatpush.msra.mxu0 %v54
    %136 = vmatpush.msra.mxu0 %v51
    %137 = vmatpush.msra.mxu0 %v48
    %138 = vmatpush.msra.mxu0 %v45
    %139 = vmatpush.msra.mxu0 %v42
    %140 = vmatpush.msra.mxu0 %v39
    %141 = vmatpush.msra.mxu0 %v36
    %142 = vmatpush.msra.mxu0 %v33
    %143 = vmatmul.f32.gmra.mxu0 %v30
    %v144 = vpop.f32.mrf.mxu0
    %v145 = vadd.f32 %v83, %v144
    %146 = vdwg.mxu0
    %v150 = vrot.slane %v125, 7
    %v151 = vrot.slane %v145, 6
    %vm152 = vcmask 1040384
    %v153 = vsel %vm152, %v105, %v150
    %vm154 = vcmask 1041408
    %v155 = vsel %vm154, %v153, %v151
    %vm156 = vcmask 1041409
    %v157 = vsel %vm156, %v105, %v150
    %vm158 = vcmask 1042433
    %v159 = vsel %vm158, %v157, %v151
    %v160 = vrot.slane %v159, 1
    %vm161 = vcmask 1042434
    %v162 = vsel %vm161, %v105, %v150
    %vm163 = vcmask 1043458
    %v164 = vsel %vm163, %v162, %v151
    %v165 = vrot.slane %v164, 2
    %vm166 = vcmask 1043459
    %v167 = vsel %vm166, %v105, %v150
    %vm168 = vcmask 1044483
    %v169 = vsel %vm168, %v167, %v151
    %v170 = vrot.slane %v169, 3
    %vm171 = vcmask 1044484
    %v172 = vsel %vm171, %v105, %v150
    %vm173 = vcmask 1045508
    %v174 = vsel %vm173, %v172, %v151
    %v175 = vrot.slane %v174, 4
    %vm176 = vcmask 1045509
    %v177 = vsel %vm176, %v105, %v150
    %vm178 = vcmask 1046533
    %v179 = vsel %vm178, %v177, %v151
    %v180 = vrot.slane %v179, 5
    %vm181 = vcmask 1046534
    %v182 = vsel %vm181, %v105, %v150
    %vm183 = vcmask 1045504
    %v184 = vsel %vm183, %v151, %v182
    %v185 = vrot.slane %v184, 6
    %vm186 = vcmask 1046528
    %v187 = vsel %vm186, %v150, %v105
    %vm188 = vcmask 1046529
    %v189 = vsel %vm188, %v151, %v187
    %v190 = vrot.slane %v189, 7
    %v199 = vlaneseq
    %vm200 = vcmp.ge.s32.totalorder %v199, 0
    %vm201 = vcmp.lt.s32.totalorder %v199, 384
    %vm202 = vmand %vm200, %vm201
    %203 = vst.msk [vmem:[#allocation4] sm:$0x7] %vm202, %v155
    %204 = vst.msk [vmem:[#allocation4 + $0x3] sm:$0x7] %vm202, %v160
    %205 = vst.msk [vmem:[#allocation4 + $0x6] sm:$0x7] %vm202, %v165
    %206 = vst.msk [vmem:[#allocation4 + $0x9] sm:$0x7] %vm202, %v170
    %207 = vst.msk [vmem:[#allocation4 + $0xc] sm:$0x7] %vm202, %v175
    %208 = vst.msk [vmem:[#allocation4 + $0xf] sm:$0x7] %vm202, %v180
    %209 = vst.msk [vmem:[#allocation4 + $0x12] sm:$0x7] %vm202, %v185
    %210 = vst.msk [vmem:[#allocation4 + $0x15] sm:$0x7] %vm202, %v190
    // Predicated region
    $region18: #{network_forward_packed.1} parent=1 // pred_check
      _
    $region19: #{network_forward_packed.1} parent=1 // pred_check_branch
      %212 = sbr.rel (0) target = $region21
    $region20: #{network_forward_packed.1} parent=1 // pred_region
      // Predicated region
      $region22: #{network_forward_packed.1} parent=20 // pred_check
        _
      $region23: #{network_forward_packed.1} parent=20 // pred_check_branch
        %214 = sbr.rel (0) target = $region25
      $region24: #{network_forward_packed.1} parent=20 // pred_region
        // Predicated region
        $region26: #{network_forward_packed.1} parent=24 // pred_check
          _
        $region27: #{network_forward_packed.1} parent=24 // pred_check_branch
          %216 = sbr.rel target = $region29
        $region28: #{network_forward_packed.1} parent=24 // pred_region
          // Predicated region
          $region41: #{network_forward_packed.1} parent=28 // pred_check
            _
          $region42: #{network_forward_packed.1} parent=28 // pred_check_branch
            %232 = sbr.rel (0) target = $region44
          $region43: #{network_forward_packed.1} parent=28 // pred_region
            %s234 = ssub.s32 8, 1
            loop: start=0, step=1, limit=1
            $region45: #{network_forward_packed.1} parent=43 // loop_pre_header
              _
            $region46: #{network_forward_packed.1} parent=43 // loop_header
              %s236 = sphi 0, %s240
              %p237 = scmp.ge.s32.totalorder %s236, 1
              %s241 = sphi [#allocation4], [#allocation4]
              %s242 = sphi %s3, %s3
            $region47: #{network_forward_packed.1} parent=43 // loop_header_branch
              %239 = sbr.rel (%p237) target = $region51
            $region48: #{network_forward_packed.1} parent=43 // loop_body
              %v243 = vld [vmem:[%s241] sm:%s234]
              %244 = vst [vmem:[%s242] sm:%s234] %v243
            $region49: #{network_forward_packed.1} parent=43 // loop_footer
              %s240 = sadd.s32 1, %s236
            $region50: #{network_forward_packed.1} parent=43 // loop_footer_branch
              %235 = sbr.rel target = $region46
            $region51: #{network_forward_packed.1} parent=43 // loop_exit
              _
          $region44: #{network_forward_packed.1} parent=28 // pred_fallthru
            _
        $region29: #{network_forward_packed.1} parent=24 // pred_fallthru
          _
        // Predicated region
        $region30: #{network_forward_packed.1} parent=24 // pred_check
          _
        $region31: #{network_forward_packed.1} parent=24 // pred_check_branch
          %218 = sbr.rel (0) target = $region33
        $region32: #{network_forward_packed.1} parent=24 // pred_region
          %s220 = ssub.s32 8, 1
          loop: start=0, step=1, limit=1
          $region34: #{network_forward_packed.1} parent=32 // loop_pre_header
            _
          $region35: #{network_forward_packed.1} parent=32 // loop_header
            %s222 = sphi 0, %s226
            %p223 = scmp.ge.s32.totalorder %s222, 1
            %s227 = sphi [#allocation4], [#allocation4]
            %s228 = sphi %s3, %s3
          $region36: #{network_forward_packed.1} parent=32 // loop_header_branch
            %225 = sbr.rel (%p223) target = $region40
          $region37: #{network_forward_packed.1} parent=32 // loop_body
            %v229 = vld [vmem:[%s227] sm:%s220]
            %230 = vst [vmem:[%s228] sm:%s220] %v229
          $region38: #{network_forward_packed.1} parent=32 // loop_footer
            %s226 = sadd.s32 1, %s222
          $region39: #{network_forward_packed.1} parent=32 // loop_footer_branch
            %221 = sbr.rel target = $region35
          $region40: #{network_forward_packed.1} parent=32 // loop_exit
            _
        $region33: #{network_forward_packed.1} parent=24 // pred_fallthru
          _
      $region25: #{network_forward_packed.1} parent=20 // pred_fallthru
        _
      %245 = vnop
    $region21: #{network_forward_packed.1} parent=1 // pred_fallthru
      _
    // Predicated region
    $region52: #{network_forward_packed.1} parent=1 // pred_check
      _
    $region53: #{network_forward_packed.1} parent=1 // pred_check_branch
      %247 = sbr.rel (0) target = $region55
    $region54: #{network_forward_packed.1} parent=1 // pred_region
      _
    $region55: #{network_forward_packed.1} parent=1 // pred_fallthru
      _
    %248 = vsyncpa [#allocation3], 1

</llo_original>
